<compile_context>
chip_gen: v5e
topology: v5e:2x2
jax: 0.10.0
libtpu: 0.0.40
codegen_flags: <defaults>
</compile_context>

<pallas_src>
import functools

import jax
import jax.numpy as jnp
import numpy as np
from jax.experimental import pallas as pl
from jax.experimental.pallas import tpu as pltpu


def _shift_left(v, k):
    """result[:, j] = v[:, j + k] (wraparound lanes are only ever garbage)."""
    if k == 0:
        return v
    return jnp.concatenate([v[:, k:], v[:, :k]], axis=1)


def cnn_kernel(x_ref, *refs, Ks, P, tp_last):
    """Forward pass for Bt lane-packed batch elements.

    refs = [w0, b0, D0, w1, b1, D1, ..., fc1_w, fc1_b, Sel, fc2_w, fc2_b, o_ref]
      w_i  : (K_i, NF, C_i)   tap-major conv weights
      b_i  : (NF, 1)
      D_i  : (Bt*T_in, Bt*T_out) 0/1 stride-P downsample
      fc1_w: (tp_last, 20, NF) tap-major fused flatten+FC1 weights
      Sel  : (Bt*tp_last, Bt)  0/1 column selection
    """
    n_conv = len(Ks)
    stage_refs = refs[: 3 * n_conv]
    w1_ref, b1_ref, sel_ref, w2_ref, b2_ref, o_ref = refs[3 * n_conv:]

    y = x_ref[...].astype(jnp.float32)           # (C_in, Bt*L) lane-packed
    for i, K in enumerate(Ks):
        w_ref = stage_refs[3 * i]                # (K, NF, C_stage)
        b_ref = stage_refs[3 * i + 1]            # (NF, 1)
        d_ref = stage_refs[3 * i + 2]            # (W_in, W_out) 0/1 downsample
        # Conv1d (stride=1, no padding): sum of K shifted full-width matmuls.
        acc = jnp.dot(w_ref[0], y, preferred_element_type=jnp.float32)
        for k in range(1, K):
            acc = acc + jnp.dot(w_ref[k], _shift_left(y, k),
                                preferred_element_type=jnp.float32)
        h = jnp.maximum(acc + b_ref[...], 0.0)   # bias + ReLU
        # MaxPool1d(kernel=P, stride=P, floor): max of P shifted copies, then
        # gather the stride-P valid positions with one 0/1 matmul (MXU).
        m = h
        for p in range(1, P):
            m = jnp.maximum(m, _shift_left(h, p))
        y = jnp.dot(m, d_ref[...], preferred_element_type=jnp.float32)

    # Flatten (channel-major) + Linear1 fused: Z[:, b*tp_last] holds the FC1
    # pre-activation for batch element b; Sel picks those columns.
    z = jnp.dot(w1_ref[0], y, preferred_element_type=jnp.float32)
    for t in range(1, tp_last):
        z = z + jnp.dot(w1_ref[t], _shift_left(y, t),
                        preferred_element_type=jnp.float32)
    out1 = jnp.maximum(
        jnp.dot(z, sel_ref[...], preferred_element_type=jnp.float32)
        + b1_ref[...], 0.0)                                   # (20, Bt)
    out = jnp.dot(w2_ref[...], out1,
                  preferred_element_type=jnp.float32) + b2_ref[...]  # (O, Bt)
    o_ref[...] = out.astype(o_ref.dtype)


def cnn_forward(x_full, params, *, L, Ks, P, NF, O, Bt=4):
    conv_params, fc1_W, fc1_b, fc2_W, fc2_b = params
    x = x_full[:, :, -L:]                        # x[:, :, -shortest:]
    B, C_in, _ = x.shape

    # Batch tile: 4 elements -> 128 lanes (L=32) and a 2-step "parallel" grid
    # so v7x uses both TensorCores.  Fall back to a single full-batch step if
    # the lane width would be misaligned.
    Bt = min(Bt, B)
    if (Bt * L) % 128 != 0:
        Bt = B
    num_steps = (B + Bt - 1) // Bt
    Bpad = num_steps * Bt
    if Bpad != B:
        x = jnp.pad(x, ((0, Bpad - B), (0, 0), (0, 0)))

    # Lane packing: (C_in, Bpad*L), batch segments contiguous along lanes.
    xp = jnp.transpose(x, (1, 0, 2)).reshape(C_in, Bpad * L)

    # Per-stage valid segment lengths (matches the module's np.floor loop).
    Ts = [L]
    for K in Ks:
        Ts.append((Ts[-1] - K + 1) // P)
    tp_last = Ts[-1]
    hidden = fc1_W.shape[0]                      # 20

    # Constant 0/1 matrices (numpy; static shapes only, folded at trace time).
    Ds = []
    for i in range(len(Ks)):
        T_in, T_out = Ts[i], Ts[i + 1]
        D = np.zeros((Bt * T_in, Bt * T_out), np.float32)
        for b in range(Bt):
            for t in range(T_out):
                D[b * T_in + t * P, b * T_out + t] = 1.0
        Ds.append(jnp.asarray(D))
    Sel = np.zeros((Bt * tp_last, Bt), np.float32)
    for b in range(Bt):
        Sel[b * tp_last, b] = 1.0
    Sel = jnp.asarray(Sel)

    # Tap-major FC1 weights: W1[t, h, c] = fc1_W[h, c*tp_last + t].
    W1 = jnp.transpose(fc1_W.reshape(hidden, NF, tp_last), (2, 0, 1))

    args = [xp]
    in_specs = [pl.BlockSpec((C_in, Bt * L), lambda g: (0, g))]
    flops = 0
    bytes_accessed = 4 * (C_in * Bpad * L + num_steps * O * Bt)
    C_stage = C_in
    for i, (w, bia) in enumerate(conv_params):
        K = w.shape[2]
        wt = jnp.transpose(w, (2, 0, 1))         # (K, NF, C_stage) tap-major
        args += [wt, bia.reshape(-1, 1), Ds[i]]
        in_specs += [
            pl.BlockSpec(wt.shape, lambda g: (0, 0, 0)),
            pl.BlockSpec((w.shape[0], 1), lambda g: (0, 0)),
            pl.BlockSpec(Ds[i].shape, lambda g: (0, 0)),
        ]
        flops += 2 * NF * C_stage * K * (Bt * Ts[i])          # conv matmuls
        flops += 2 * NF * (Bt * Ts[i]) * (Bt * Ts[i + 1])     # downsample
        bytes_accessed += 4 * (wt.size + bia.size + Ds[i].size)
        C_stage = NF
    args += [W1, fc1_b.reshape(-1, 1), Sel, fc2_W, fc2_b.reshape(-1, 1)]
    in_specs += [
        pl.BlockSpec(W1.shape, lambda g: (0, 0, 0)),
        pl.BlockSpec((hidden, 1), lambda g: (0, 0)),
        pl.BlockSpec(Sel.shape, lambda g: (0, 0)),
        pl.BlockSpec(fc2_W.shape, lambda g: (0, 0)),
        pl.BlockSpec((O, 1), lambda g: (0, 0)),
    ]
    flops += 2 * hidden * NF * tp_last * (Bt * tp_last)        # fused FC1
    flops += 2 * hidden * (Bt * tp_last) * Bt                  # selection
    flops += 2 * O * hidden * Bt                               # FC2
    flops *= num_steps
    bytes_accessed += 4 * (W1.size + hidden + Sel.size + fc2_W.size + O)

    kernel = functools.partial(cnn_kernel, Ks=tuple(Ks), P=P, tp_last=tp_last)
    out = pl.pallas_call(
        kernel,
        out_shape=jax.ShapeDtypeStruct((num_steps, O, Bt), jnp.float32),
        grid=(num_steps,),
        in_specs=in_specs,
        out_specs=pl.BlockSpec((None, O, Bt), lambda g: (g, 0, 0)),
        compiler_params=pltpu.CompilerParams(dimension_semantics=("parallel",)),
        cost_estimate=pl.CostEstimate(flops=int(flops), transcendentals=0,
                                      bytes_accessed=int(bytes_accessed)),
    )(*args)
    # (num_steps, O, Bt) -> (Bpad, O) -> (B, O)
    out = jnp.transpose(out, (0, 2, 1)).reshape(Bpad, O)
    return out[:B]


def reference_forward(x_full, params, *, L, Ks, P):
    """Pure-JAX reference mirroring the PyTorch module."""
    conv_params, fc1_W, fc1_b, fc2_W, fc2_b = params
    y = x_full[:, :, -L:]
    for (w, b) in conv_params:
        K = w.shape[2]
        t_out = y.shape[2] - K + 1
        acc = sum(jnp.einsum('oc,bct->bot', w[:, :, k], y[:, :, k:k + t_out])
                  for k in range(K))
        acc = jax.nn.relu(acc + b[None, :, None])
        tp = t_out // P
        y = acc[:, :, :tp * P].reshape(acc.shape[0], acc.shape[1], tp, P).max(-1)
    flat = y.reshape(y.shape[0], -1)
    h = jax.nn.relu(flat @ fc1_W.T + fc1_b)
    return h @ fc2_W.T + fc2_b


if __name__ == "__main__":
    # Module hyperparameters (small, consistent with the forward pass).
    B, C_in, T_full = 8, 4, 40          # input: (batch, input_size, time)
    O = 3                               # output_size
    L = 32                              # length_of_shortest_time_series
    P = 2                               # pooling_size
    Ks = (3, 3)                         # kernel_size list
    NF = 8                              # num_of_filters
    # overparam=False head: Linear(F, 20) -> ReLU -> Linear(20, O)

    key = jax.random.PRNGKey(0)
    keys = jax.random.split(key, 2 * len(Ks) + 5)
    idx = 0
    conv_params = []
    in_c = C_in
    for K in Ks:
        w = 0.1 * jax.random.normal(keys[idx], (NF, in_c, K), jnp.float32); idx += 1
        b = 0.1 * jax.random.normal(keys[idx], (NF,), jnp.float32); idx += 1
        conv_params.append((w, b))
        in_c = NF

    t = L
    for K in Ks:
        t = (t - K + 1) // P
    F = NF * t  # fully_connected_features

    fc1_W = 0.1 * jax.random.normal(keys[idx], (20, F), jnp.float32); idx += 1
    fc1_b = 0.1 * jax.random.normal(keys[idx], (20,), jnp.float32); idx += 1
    fc2_W = 0.1 * jax.random.normal(keys[idx], (O, 20), jnp.float32); idx += 1
    fc2_b = 0.1 * jax.random.normal(keys[idx], (O,), jnp.float32); idx += 1
    params = (conv_params, fc1_W, fc1_b, fc2_W, fc2_b)

    x = jax.random.normal(keys[idx], (B, C_in, T_full), jnp.float32)

    fwd = jax.jit(functools.partial(cnn_forward, L=L, Ks=Ks, P=P, NF=NF, O=O, Bt=4))
    out = fwd(x, params)
    out = jax.block_until_ready(out)

    ref = reference_forward(x, params, L=L, Ks=Ks, P=P)
    np.testing.assert_allclose(np.asarray(out), np.asarray(ref),
                               rtol=2e-4, atol=2e-4)
    print("KERNEL_OK")
</pallas_src>

<mosaic_0001>
module attributes {stable_mosaic.version = 11 : i64} {
  func.func @cnn_kernel(%arg0: i32, %arg1: memref<4x128xf32, #tpu.memory_space<vmem>>, %arg2: memref<3x8x4xf32, #tpu.memory_space<vmem>>, %arg3: memref<8x1xf32, #tpu.memory_space<vmem>>, %arg4: memref<128x60xf32, #tpu.memory_space<vmem>>, %arg5: memref<3x8x8xf32, #tpu.memory_space<vmem>>, %arg6: memref<8x1xf32, #tpu.memory_space<vmem>>, %arg7: memref<60x24xf32, #tpu.memory_space<vmem>>, %arg8: memref<6x20x8xf32, #tpu.memory_space<vmem>>, %arg9: memref<20x1xf32, #tpu.memory_space<vmem>>, %arg10: memref<24x4xf32, #tpu.memory_space<vmem>>, %arg11: memref<3x20xf32, #tpu.memory_space<vmem>>, %arg12: memref<3x1xf32, #tpu.memory_space<vmem>>, %arg13: memref<1x3x4xf32, #tpu.memory_space<vmem>>) attributes {dimension_semantics = [#tpu.dimension_semantics<parallel>], iteration_bounds = array<i64: 2>, scalar_prefetch = 0 : i64, scratch_operands = 0 : i64, tpu.core_type = #tpu.core_type<tc>, window_params = [{transform_indices = @transform_0, window_bounds = array<i64: 4, 128>}, {pipeline_mode = #tpu.pipeline_mode<synchronous>, transform_indices = @transform_1, window_bounds = array<i64: 3, 8, 4>}, {pipeline_mode = #tpu.pipeline_mode<synchronous>, transform_indices = @transform_2, window_bounds = array<i64: 8, 1>}, {pipeline_mode = #tpu.pipeline_mode<synchronous>, transform_indices = @transform_3, window_bounds = array<i64: 128, 60>}, {pipeline_mode = #tpu.pipeline_mode<synchronous>, transform_indices = @transform_4, window_bounds = array<i64: 3, 8, 8>}, {pipeline_mode = #tpu.pipeline_mode<synchronous>, transform_indices = @transform_5, window_bounds = array<i64: 8, 1>}, {pipeline_mode = #tpu.pipeline_mode<synchronous>, transform_indices = @transform_6, window_bounds = array<i64: 60, 24>}, {pipeline_mode = #tpu.pipeline_mode<synchronous>, transform_indices = @transform_7, window_bounds = array<i64: 6, 20, 8>}, {pipeline_mode = #tpu.pipeline_mode<synchronous>, transform_indices = @transform_8, window_bounds = array<i64: 20, 1>}, {pipeline_mode = #tpu.pipeline_mode<synchronous>, transform_indices = @transform_9, window_bounds = array<i64: 24, 4>}, {pipeline_mode = #tpu.pipeline_mode<synchronous>, transform_indices = @transform_10, window_bounds = array<i64: 3, 20>}, {pipeline_mode = #tpu.pipeline_mode<synchronous>, transform_indices = @transform_11, window_bounds = array<i64: 3, 1>}, {transform_indices = @transform_12, window_bounds = array<i64: 1, 3, 4>}]} {
    %c0 = arith.constant 0 : index
    %c0_0 = arith.constant 0 : index
    %0 = vector.load %arg1[%c0, %c0_0] : memref<4x128xf32, #tpu.memory_space<vmem>>, vector<4x128xf32>
    %c0_1 = arith.constant 0 : index
    %c0_2 = arith.constant 0 : index
    %c0_3 = arith.constant 0 : index
    %1 = vector.load %arg2[%c0_1, %c0_2, %c0_3] : memref<3x8x4xf32, #tpu.memory_space<vmem>>, vector<1x8x4xf32>
    %2 = vector.shape_cast %1 : vector<1x8x4xf32> to vector<8x4xf32>
    %cst = arith.constant dense<0.000000e+00> : vector<8x128xf32>
    %3 = tpu.matmul %2, %0, %cst {dimension_numbers = #tpu.dot_dimension_numbers<[1], [0], [0], [1], [0, 0, 1, 1], [], []>} : vector<8x4xf32>, vector<4x128xf32>, vector<8x128xf32> -> vector<8x128xf32>
    %c1 = arith.constant 1 : index
    %c0_4 = arith.constant 0 : index
    %c0_5 = arith.constant 0 : index
    %4 = vector.load %arg2[%c1, %c0_4, %c0_5] : memref<3x8x4xf32, #tpu.memory_space<vmem>>, vector<1x8x4xf32>
    %5 = vector.shape_cast %4 : vector<1x8x4xf32> to vector<8x4xf32>
    %6 = vector.extract_strided_slice %0 {offsets = [0, 1], sizes = [4, 127], strides = [1, 1]} : vector<4x128xf32> to vector<4x127xf32>
    %7 = vector.extract_strided_slice %0 {offsets = [0, 0], sizes = [4, 1], strides = [1, 1]} : vector<4x128xf32> to vector<4x1xf32>
    %8 = tpu.concatenate %6, %7 in 1 : vector<4x127xf32>, vector<4x1xf32> -> vector<4x128xf32>
    %cst_6 = arith.constant dense<0.000000e+00> : vector<8x128xf32>
    %9 = tpu.matmul %5, %8, %cst_6 {dimension_numbers = #tpu.dot_dimension_numbers<[1], [0], [0], [1], [0, 0, 1, 1], [], []>} : vector<8x4xf32>, vector<4x128xf32>, vector<8x128xf32> -> vector<8x128xf32>
    %10 = arith.addf %3, %9 : vector<8x128xf32>
    %c2 = arith.constant 2 : index
    %c0_7 = arith.constant 0 : index
    %c0_8 = arith.constant 0 : index
    %11 = vector.load %arg2[%c2, %c0_7, %c0_8] : memref<3x8x4xf32, #tpu.memory_space<vmem>>, vector<1x8x4xf32>
    %12 = vector.shape_cast %11 : vector<1x8x4xf32> to vector<8x4xf32>
    %13 = vector.extract_strided_slice %0 {offsets = [0, 2], sizes = [4, 126], strides = [1, 1]} : vector<4x128xf32> to vector<4x126xf32>
    %14 = vector.extract_strided_slice %0 {offsets = [0, 0], sizes = [4, 2], strides = [1, 1]} : vector<4x128xf32> to vector<4x2xf32>
    %15 = tpu.concatenate %13, %14 in 1 : vector<4x126xf32>, vector<4x2xf32> -> vector<4x128xf32>
    %cst_9 = arith.constant dense<0.000000e+00> : vector<8x128xf32>
    %16 = tpu.matmul %12, %15, %cst_9 {dimension_numbers = #tpu.dot_dimension_numbers<[1], [0], [0], [1], [0, 0, 1, 1], [], []>} : vector<8x4xf32>, vector<4x128xf32>, vector<8x128xf32> -> vector<8x128xf32>
    %17 = arith.addf %10, %16 : vector<8x128xf32>
    %c0_10 = arith.constant 0 : index
    %c0_11 = arith.constant 0 : index
    %18 = vector.load %arg3[%c0_10, %c0_11] : memref<8x1xf32, #tpu.memory_space<vmem>>, vector<8x1xf32>
    %19 = vector.broadcast %18 : vector<8x1xf32> to vector<8x128xf32>
    %20 = arith.addf %17, %19 : vector<8x128xf32>
    %cst_12 = arith.constant 0.000000e+00 : f32
    %21 = vector.broadcast %cst_12 : f32 to vector<8x128xf32>
    %22 = arith.maximumf %20, %21 : vector<8x128xf32>
    %23 = vector.extract_strided_slice %22 {offsets = [0, 1], sizes = [8, 127], strides = [1, 1]} : vector<8x128xf32> to vector<8x127xf32>
    %24 = vector.extract_strided_slice %22 {offsets = [0, 0], sizes = [8, 1], strides = [1, 1]} : vector<8x128xf32> to vector<8x1xf32>
    %25 = tpu.concatenate %23, %24 in 1 : vector<8x127xf32>, vector<8x1xf32> -> vector<8x128xf32>
    %26 = arith.maximumf %22, %25 : vector<8x128xf32>
    %c0_13 = arith.constant 0 : index
    %c0_14 = arith.constant 0 : index
    %27 = vector.load %arg4[%c0_13, %c0_14] : memref<128x60xf32, #tpu.memory_space<vmem>>, vector<128x60xf32>
    %cst_15 = arith.constant dense<0.000000e+00> : vector<8x60xf32>
    %28 = tpu.matmul %26, %27, %cst_15 {dimension_numbers = #tpu.dot_dimension_numbers<[1], [0], [0], [1], [0, 0, 1, 1], [], []>} : vector<8x128xf32>, vector<128x60xf32>, vector<8x60xf32> -> vector<8x60xf32>
    %c0_16 = arith.constant 0 : index
    %c0_17 = arith.constant 0 : index
    %c0_18 = arith.constant 0 : index
    %29 = vector.load %arg5[%c0_16, %c0_17, %c0_18] : memref<3x8x8xf32, #tpu.memory_space<vmem>>, vector<1x8x8xf32>
    %30 = vector.shape_cast %29 : vector<1x8x8xf32> to vector<8x8xf32>
    %cst_19 = arith.constant dense<0.000000e+00> : vector<8x60xf32>
    %31 = tpu.matmul %30, %28, %cst_19 {dimension_numbers = #tpu.dot_dimension_numbers<[1], [0], [0], [1], [0, 0, 1, 1], [], []>} : vector<8x8xf32>, vector<8x60xf32>, vector<8x60xf32> -> vector<8x60xf32>
    %c1_20 = arith.constant 1 : index
    %c0_21 = arith.constant 0 : index
    %c0_22 = arith.constant 0 : index
    %32 = vector.load %arg5[%c1_20, %c0_21, %c0_22] : memref<3x8x8xf32, #tpu.memory_space<vmem>>, vector<1x8x8xf32>
    %33 = vector.shape_cast %32 : vector<1x8x8xf32> to vector<8x8xf32>
    %34 = vector.extract_strided_slice %28 {offsets = [0, 1], sizes = [8, 59], strides = [1, 1]} : vector<8x60xf32> to vector<8x59xf32>
    %35 = vector.extract_strided_slice %28 {offsets = [0, 0], sizes = [8, 1], strides = [1, 1]} : vector<8x60xf32> to vector<8x1xf32>
    %36 = tpu.concatenate %34, %35 in 1 : vector<8x59xf32>, vector<8x1xf32> -> vector<8x60xf32>
    %cst_23 = arith.constant dense<0.000000e+00> : vector<8x60xf32>
    %37 = tpu.matmul %33, %36, %cst_23 {dimension_numbers = #tpu.dot_dimension_numbers<[1], [0], [0], [1], [0, 0, 1, 1], [], []>} : vector<8x8xf32>, vector<8x60xf32>, vector<8x60xf32> -> vector<8x60xf32>
    %38 = arith.addf %31, %37 : vector<8x60xf32>
    %c2_24 = arith.constant 2 : index
    %c0_25 = arith.constant 0 : index
    %c0_26 = arith.constant 0 : index
    %39 = vector.load %arg5[%c2_24, %c0_25, %c0_26] : memref<3x8x8xf32, #tpu.memory_space<vmem>>, vector<1x8x8xf32>
    %40 = vector.shape_cast %39 : vector<1x8x8xf32> to vector<8x8xf32>
    %41 = vector.extract_strided_slice %28 {offsets = [0, 2], sizes = [8, 58], strides = [1, 1]} : vector<8x60xf32> to vector<8x58xf32>
    %42 = vector.extract_strided_slice %28 {offsets = [0, 0], sizes = [8, 2], strides = [1, 1]} : vector<8x60xf32> to vector<8x2xf32>
    %43 = tpu.concatenate %41, %42 in 1 : vector<8x58xf32>, vector<8x2xf32> -> vector<8x60xf32>
    %cst_27 = arith.constant dense<0.000000e+00> : vector<8x60xf32>
    %44 = tpu.matmul %40, %43, %cst_27 {dimension_numbers = #tpu.dot_dimension_numbers<[1], [0], [0], [1], [0, 0, 1, 1], [], []>} : vector<8x8xf32>, vector<8x60xf32>, vector<8x60xf32> -> vector<8x60xf32>
    %45 = arith.addf %38, %44 : vector<8x60xf32>
    %c0_28 = arith.constant 0 : index
    %c0_29 = arith.constant 0 : index
    %46 = vector.load %arg6[%c0_28, %c0_29] : memref<8x1xf32, #tpu.memory_space<vmem>>, vector<8x1xf32>
    %47 = vector.broadcast %46 : vector<8x1xf32> to vector<8x60xf32>
    %48 = arith.addf %45, %47 : vector<8x60xf32>
    %cst_30 = arith.constant 0.000000e+00 : f32
    %49 = vector.broadcast %cst_30 : f32 to vector<8x60xf32>
    %50 = arith.maximumf %48, %49 : vector<8x60xf32>
    %51 = vector.extract_strided_slice %50 {offsets = [0, 1], sizes = [8, 59], strides = [1, 1]} : vector<8x60xf32> to vector<8x59xf32>
    %52 = vector.extract_strided_slice %50 {offsets = [0, 0], sizes = [8, 1], strides = [1, 1]} : vector<8x60xf32> to vector<8x1xf32>
    %53 = tpu.concatenate %51, %52 in 1 : vector<8x59xf32>, vector<8x1xf32> -> vector<8x60xf32>
    %54 = arith.maximumf %50, %53 : vector<8x60xf32>
    %c0_31 = arith.constant 0 : index
    %c0_32 = arith.constant 0 : index
    %55 = vector.load %arg7[%c0_31, %c0_32] : memref<60x24xf32, #tpu.memory_space<vmem>>, vector<60x24xf32>
    %cst_33 = arith.constant dense<0.000000e+00> : vector<8x24xf32>
    %56 = tpu.matmul %54, %55, %cst_33 {dimension_numbers = #tpu.dot_dimension_numbers<[1], [0], [0], [1], [0, 0, 1, 1], [], []>} : vector<8x60xf32>, vector<60x24xf32>, vector<8x24xf32> -> vector<8x24xf32>
    %c0_34 = arith.constant 0 : index
    %c0_35 = arith.constant 0 : index
    %c0_36 = arith.constant 0 : index
    %57 = vector.load %arg8[%c0_34, %c0_35, %c0_36] : memref<6x20x8xf32, #tpu.memory_space<vmem>>, vector<1x20x8xf32>
    %58 = vector.shape_cast %57 : vector<1x20x8xf32> to vector<20x8xf32>
    %cst_37 = arith.constant dense<0.000000e+00> : vector<20x24xf32>
    %59 = tpu.matmul %58, %56, %cst_37 {dimension_numbers = #tpu.dot_dimension_numbers<[1], [0], [0], [1], [0, 0, 1, 1], [], []>} : vector<20x8xf32>, vector<8x24xf32>, vector<20x24xf32> -> vector<20x24xf32>
    %c1_38 = arith.constant 1 : index
    %c0_39 = arith.constant 0 : index
    %c0_40 = arith.constant 0 : index
    %60 = vector.load %arg8[%c1_38, %c0_39, %c0_40] : memref<6x20x8xf32, #tpu.memory_space<vmem>>, vector<1x20x8xf32>
    %61 = vector.shape_cast %60 : vector<1x20x8xf32> to vector<20x8xf32>
    %62 = vector.extract_strided_slice %56 {offsets = [0, 1], sizes = [8, 23], strides = [1, 1]} : vector<8x24xf32> to vector<8x23xf32>
    %63 = vector.extract_strided_slice %56 {offsets = [0, 0], sizes = [8, 1], strides = [1, 1]} : vector<8x24xf32> to vector<8x1xf32>
    %64 = tpu.concatenate %62, %63 in 1 : vector<8x23xf32>, vector<8x1xf32> -> vector<8x24xf32>
    %cst_41 = arith.constant dense<0.000000e+00> : vector<20x24xf32>
    %65 = tpu.matmul %61, %64, %cst_41 {dimension_numbers = #tpu.dot_dimension_numbers<[1], [0], [0], [1], [0, 0, 1, 1], [], []>} : vector<20x8xf32>, vector<8x24xf32>, vector<20x24xf32> -> vector<20x24xf32>
    %66 = arith.addf %59, %65 : vector<20x24xf32>
    %c2_42 = arith.constant 2 : index
    %c0_43 = arith.constant 0 : index
    %c0_44 = arith.constant 0 : index
    %67 = vector.load %arg8[%c2_42, %c0_43, %c0_44] : memref<6x20x8xf32, #tpu.memory_space<vmem>>, vector<1x20x8xf32>
    %68 = vector.shape_cast %67 : vector<1x20x8xf32> to vector<20x8xf32>
    %69 = vector.extract_strided_slice %56 {offsets = [0, 2], sizes = [8, 22], strides = [1, 1]} : vector<8x24xf32> to vector<8x22xf32>
    %70 = vector.extract_strided_slice %56 {offsets = [0, 0], sizes = [8, 2], strides = [1, 1]} : vector<8x24xf32> to vector<8x2xf32>
    %71 = tpu.concatenate %69, %70 in 1 : vector<8x22xf32>, vector<8x2xf32> -> vector<8x24xf32>
    %cst_45 = arith.constant dense<0.000000e+00> : vector<20x24xf32>
    %72 = tpu.matmul %68, %71, %cst_45 {dimension_numbers = #tpu.dot_dimension_numbers<[1], [0], [0], [1], [0, 0, 1, 1], [], []>} : vector<20x8xf32>, vector<8x24xf32>, vector<20x24xf32> -> vector<20x24xf32>
    %73 = arith.addf %66, %72 : vector<20x24xf32>
    %c3 = arith.constant 3 : index
    %c0_46 = arith.constant 0 : index
    %c0_47 = arith.constant 0 : index
    %74 = vector.load %arg8[%c3, %c0_46, %c0_47] : memref<6x20x8xf32, #tpu.memory_space<vmem>>, vector<1x20x8xf32>
    %75 = vector.shape_cast %74 : vector<1x20x8xf32> to vector<20x8xf32>
    %76 = vector.extract_strided_slice %56 {offsets = [0, 3], sizes = [8, 21], strides = [1, 1]} : vector<8x24xf32> to vector<8x21xf32>
    %77 = vector.extract_strided_slice %56 {offsets = [0, 0], sizes = [8, 3], strides = [1, 1]} : vector<8x24xf32> to vector<8x3xf32>
    %78 = tpu.concatenate %76, %77 in 1 : vector<8x21xf32>, vector<8x3xf32> -> vector<8x24xf32>
    %cst_48 = arith.constant dense<0.000000e+00> : vector<20x24xf32>
    %79 = tpu.matmul %75, %78, %cst_48 {dimension_numbers = #tpu.dot_dimension_numbers<[1], [0], [0], [1], [0, 0, 1, 1], [], []>} : vector<20x8xf32>, vector<8x24xf32>, vector<20x24xf32> -> vector<20x24xf32>
    %80 = arith.addf %73, %79 : vector<20x24xf32>
    %c4 = arith.constant 4 : index
    %c0_49 = arith.constant 0 : index
    %c0_50 = arith.constant 0 : index
    %81 = vector.load %arg8[%c4, %c0_49, %c0_50] : memref<6x20x8xf32, #tpu.memory_space<vmem>>, vector<1x20x8xf32>
    %82 = vector.shape_cast %81 : vector<1x20x8xf32> to vector<20x8xf32>
    %83 = vector.extract_strided_slice %56 {offsets = [0, 4], sizes = [8, 20], strides = [1, 1]} : vector<8x24xf32> to vector<8x20xf32>
    %84 = vector.extract_strided_slice %56 {offsets = [0, 0], sizes = [8, 4], strides = [1, 1]} : vector<8x24xf32> to vector<8x4xf32>
    %85 = tpu.concatenate %83, %84 in 1 : vector<8x20xf32>, vector<8x4xf32> -> vector<8x24xf32>
    %cst_51 = arith.constant dense<0.000000e+00> : vector<20x24xf32>
    %86 = tpu.matmul %82, %85, %cst_51 {dimension_numbers = #tpu.dot_dimension_numbers<[1], [0], [0], [1], [0, 0, 1, 1], [], []>} : vector<20x8xf32>, vector<8x24xf32>, vector<20x24xf32> -> vector<20x24xf32>
    %87 = arith.addf %80, %86 : vector<20x24xf32>
    %c5 = arith.constant 5 : index
    %c0_52 = arith.constant 0 : index
    %c0_53 = arith.constant 0 : index
    %88 = vector.load %arg8[%c5, %c0_52, %c0_53] : memref<6x20x8xf32, #tpu.memory_space<vmem>>, vector<1x20x8xf32>
    %89 = vector.shape_cast %88 : vector<1x20x8xf32> to vector<20x8xf32>
    %90 = vector.extract_strided_slice %56 {offsets = [0, 5], sizes = [8, 19], strides = [1, 1]} : vector<8x24xf32> to vector<8x19xf32>
    %91 = vector.extract_strided_slice %56 {offsets = [0, 0], sizes = [8, 5], strides = [1, 1]} : vector<8x24xf32> to vector<8x5xf32>
    %92 = tpu.concatenate %90, %91 in 1 : vector<8x19xf32>, vector<8x5xf32> -> vector<8x24xf32>
    %cst_54 = arith.constant dense<0.000000e+00> : vector<20x24xf32>
    %93 = tpu.matmul %89, %92, %cst_54 {dimension_numbers = #tpu.dot_dimension_numbers<[1], [0], [0], [1], [0, 0, 1, 1], [], []>} : vector<20x8xf32>, vector<8x24xf32>, vector<20x24xf32> -> vector<20x24xf32>
    %94 = arith.addf %87, %93 : vector<20x24xf32>
    %c0_55 = arith.constant 0 : index
    %c0_56 = arith.constant 0 : index
    %95 = vector.load %arg10[%c0_55, %c0_56] : memref<24x4xf32, #tpu.memory_space<vmem>>, vector<24x4xf32>
    %cst_57 = arith.constant dense<0.000000e+00> : vector<20x4xf32>
    %96 = tpu.matmul %94, %95, %cst_57 {dimension_numbers = #tpu.dot_dimension_numbers<[1], [0], [0], [1], [0, 0, 1, 1], [], []>} : vector<20x24xf32>, vector<24x4xf32>, vector<20x4xf32> -> vector<20x4xf32>
    %c0_58 = arith.constant 0 : index
    %c0_59 = arith.constant 0 : index
    %97 = vector.load %arg9[%c0_58, %c0_59] : memref<20x1xf32, #tpu.memory_space<vmem>>, vector<20x1xf32>
    %98 = vector.broadcast %97 : vector<20x1xf32> to vector<20x4xf32>
    %99 = arith.addf %96, %98 : vector<20x4xf32>
    %cst_60 = arith.constant 0.000000e+00 : f32
    %100 = vector.broadcast %cst_60 : f32 to vector<20x4xf32>
    %101 = arith.maximumf %99, %100 : vector<20x4xf32>
    %c0_61 = arith.constant 0 : index
    %c0_62 = arith.constant 0 : index
    %102 = vector.load %arg11[%c0_61, %c0_62] : memref<3x20xf32, #tpu.memory_space<vmem>>, vector<3x20xf32>
    %cst_63 = arith.constant dense<0.000000e+00> : vector<3x4xf32>
    %103 = tpu.matmul %102, %101, %cst_63 {dimension_numbers = #tpu.dot_dimension_numbers<[1], [0], [0], [1], [0, 0, 1, 1], [], []>} : vector<3x20xf32>, vector<20x4xf32>, vector<3x4xf32> -> vector<3x4xf32>
    %c0_64 = arith.constant 0 : index
    %c0_65 = arith.constant 0 : index
    %104 = vector.load %arg12[%c0_64, %c0_65] : memref<3x1xf32, #tpu.memory_space<vmem>>, vector<3x1xf32>
    %105 = vector.broadcast %104 : vector<3x1xf32> to vector<3x4xf32>
    %106 = arith.addf %103, %105 : vector<3x4xf32>
    %c0_66 = arith.constant 0 : index
    %c0_67 = arith.constant 0 : index
    %c0_68 = arith.constant 0 : index
    %107 = vector.load %arg13[%c0_66, %c0_67, %c0_68] : memref<1x3x4xf32, #tpu.memory_space<vmem>>, vector<1x3x4xf32>
    %108 = vector.shape_cast %107 : vector<1x3x4xf32> to vector<3x4xf32>
    %109 = vector.shape_cast %106 : vector<3x4xf32> to vector<1x3x4xf32>
    tpu.vector_store %arg13[%c0_66, %c0_67, %c0_68], %109 {strides = array<i32>} : memref<1x3x4xf32, #tpu.memory_space<vmem>>, vector<1x3x4xf32>,
    return
  }
  func.func @transform_0(%arg0: i32) -> (i32, i32) {
    %c0_i32 = arith.constant 0 : i32
    %c0_i32_0 = arith.constant 0 : i32
    return %c0_i32, %arg0 : i32, i32
  }
  func.func @transform_1(%arg0: i32) -> (i32, i32, i32) {
    %c0_i32 = arith.constant 0 : i32
    %c0_i32_0 = arith.constant 0 : i32
    %c0_i32_1 = arith.constant 0 : i32
    %c0_i32_2 = arith.constant 0 : i32
    return %c0_i32, %c0_i32_0, %c0_i32_1 : i32, i32, i32
  }
  func.func @transform_2(%arg0: i32) -> (i32, i32) {
    %c0_i32 = arith.constant 0 : i32
    %c0_i32_0 = arith.constant 0 : i32
    %c0_i32_1 = arith.constant 0 : i32
    return %c0_i32, %c0_i32_0 : i32, i32
  }
  func.func @transform_3(%arg0: i32) -> (i32, i32) {
    %c0_i32 = arith.constant 0 : i32
    %c0_i32_0 = arith.constant 0 : i32
    %c0_i32_1 = arith.constant 0 : i32
    return %c0_i32, %c0_i32_0 : i32, i32
  }
  func.func @transform_4(%arg0: i32) -> (i32, i32, i32) {
    %c0_i32 = arith.constant 0 : i32
    %c0_i32_0 = arith.constant 0 : i32
    %c0_i32_1 = arith.constant 0 : i32
    %c0_i32_2 = arith.constant 0 : i32
    return %c0_i32, %c0_i32_0, %c0_i32_1 : i32, i32, i32
  }
  func.func @transform_5(%arg0: i32) -> (i32, i32) {
    %c0_i32 = arith.constant 0 : i32
    %c0_i32_0 = arith.constant 0 : i32
    %c0_i32_1 = arith.constant 0 : i32
    return %c0_i32, %c0_i32_0 : i32, i32
  }
  func.func @transform_6(%arg0: i32) -> (i32, i32) {
    %c0_i32 = arith.constant 0 : i32
    %c0_i32_0 = arith.constant 0 : i32
    %c0_i32_1 = arith.constant 0 : i32
    return %c0_i32, %c0_i32_0 : i32, i32
  }
  func.func @transform_7(%arg0: i32) -> (i32, i32, i32) {
    %c0_i32 = arith.constant 0 : i32
    %c0_i32_0 = arith.constant 0 : i32
    %c0_i32_1 = arith.constant 0 : i32
    %c0_i32_2 = arith.constant 0 : i32
    return %c0_i32, %c0_i32_0, %c0_i32_1 : i32, i32, i32
  }
  func.func @transform_8(%arg0: i32) -> (i32, i32) {
    %c0_i32 = arith.constant 0 : i32
    %c0_i32_0 = arith.constant 0 : i32
    %c0_i32_1 = arith.constant 0 : i32
    return %c0_i32, %c0_i32_0 : i32, i32
  }
  func.func @transform_9(%arg0: i32) -> (i32, i32) {
    %c0_i32 = arith.constant 0 : i32
    %c0_i32_0 = arith.constant 0 : i32
    %c0_i32_1 = arith.constant 0 : i32
    return %c0_i32, %c0_i32_0 : i32, i32
  }
  func.func @transform_10(%arg0: i32) -> (i32, i32) {
    %c0_i32 = arith.constant 0 : i32
    %c0_i32_0 = arith.constant 0 : i32
    %c0_i32_1 = arith.constant 0 : i32
    return %c0_i32, %c0_i32_0 : i32, i32
  }
  func.func @transform_11(%arg0: i32) -> (i32, i32) {
    %c0_i32 = arith.constant 0 : i32
    %c0_i32_0 = arith.constant 0 : i32
    %c0_i32_1 = arith.constant 0 : i32
    return %c0_i32, %c0_i32_0 : i32, i32
  }
  func.func @transform_12(%arg0: i32) -> (i32, i32, i32) {
    %c0_i32 = arith.constant 0 : i32
    %c0_i32_0 = arith.constant 0 : i32
    %c0_i32_1 = arith.constant 0 : i32
    return %arg0, %c0_i32, %c0_i32_0 : i32, i32, i32
  }
}

</mosaic_0001>

<llo_original>
// kernel: cnn_forward.1
$region0: #{cnn_forward.1}
  #allocation0 [shape = 'u32[]', space=smem, size = 0x4, offset = 0x4, fixed_abs, tag = 'smem constant byte address 0x4 - core index']
  #allocation1 [shape = 'u32[72,128]{1,0:T(1,128)}', space=vmem, size = 0x9000, scoped, tag = 'internal scratch']
  %s0 = inlined_call_operand.vmem [shape: f32[4,256], index: 0, kind: input, shape index: {}]
  %s1 = inlined_call_operand.vmem [shape: f32[3,8,4], index: 1, kind: input, shape index: {}]
  %s2 = inlined_call_operand.vmem [shape: f32[8,1], index: 2, kind: input, shape index: {}]
  %s3 = inlined_call_operand.vmem [shape: f32[128,60], index: 3, kind: input, shape index: {}]
  %s4 = inlined_call_operand.vmem [shape: f32[3,8,8], index: 4, kind: input, shape index: {}]
  %s5 = inlined_call_operand.vmem [shape: f32[8,1], index: 5, kind: input, shape index: {}]
  %s6 = inlined_call_operand.vmem [shape: f32[60,24], index: 6, kind: input, shape index: {}]
  %s7 = inlined_call_operand.vmem [shape: f32[6,20,8], index: 7, kind: input, shape index: {}]
  %s8 = inlined_call_operand.vmem [shape: f32[20,1], index: 8, kind: input, shape index: {}]
  %s9 = inlined_call_operand.vmem [shape: f32[24,4], index: 9, kind: input, shape index: {}]
  %s10 = inlined_call_operand.vmem [shape: f32[3,20], index: 10, kind: input, shape index: {}]
  %s11 = inlined_call_operand.vmem [shape: f32[3,1], index: 11, kind: input, shape index: {}]
  %s12 = inlined_call_operand.vmem [shape: f32[2,3,4], index: 12, kind: output, shape index: {}]
  %s13 = sld [smem:[#allocation0]]
  $region81: #{cnn_forward.1} parent=0
    _
  %s15 = ssub.s32 1, %s13
  %s16 = scalar_select 0, %s15, %s13
  loop: start=0, step=1, limit=4
  $region2: #{cnn_forward.1} parent=0 // loop_pre_header
    _
  $region3: #{cnn_forward.1} parent=0 // loop_header
    %s18 = sphi 0, %s22
    %p19 = scmp.ge.s32.totalorder %s18, 4
    %s28 = sphi 0, %s30
    %s31 = sphi 0, %s28
    %s32 = sphi 0, %s31
    %s48 = sphi 0, %s32
    %s52 = sphi 0, %s52
    %s54 = sphi 0, %s52
    %s55 = sphi 0, %s54
    %s69 = sphi 0, %s55
    %s73 = sphi 0, %s73
    %s75 = sphi 0, %s73
    %s76 = sphi 0, %s75
    %s90 = sphi 0, %s76
    %s94 = sphi 0, %s94
    %s96 = sphi 0, %s94
    %s97 = sphi 0, %s96
    %s111 = sphi 0, %s97
    %s115 = sphi 0, %s115
    %s117 = sphi 0, %s115
    %s118 = sphi 0, %s117
    %s132 = sphi 0, %s118
    %s136 = sphi 0, %s136
    %s138 = sphi 0, %s136
    %s139 = sphi 0, %s138
    %s153 = sphi 0, %s139
    %s157 = sphi 0, %s157
    %s159 = sphi 0, %s157
    %s160 = sphi 0, %s159
    %s174 = sphi 0, %s160
    %s178 = sphi 0, %s178
    %s180 = sphi 0, %s178
    %s181 = sphi 0, %s180
    %s195 = sphi 0, %s181
    %s199 = sphi 0, %s199
    %s201 = sphi 0, %s199
    %s202 = sphi 0, %s201
    %s216 = sphi 0, %s202
    %s220 = sphi 0, %s220
    %s222 = sphi 0, %s220
    %s223 = sphi 0, %s222
    %s237 = sphi 0, %s223
    %s241 = sphi 0, %s241
    %s243 = sphi 0, %s241
    %s244 = sphi 0, %s243
    %s258 = sphi 0, %s244
    %s262 = sphi 0, %s262
    %s264 = sphi 0, %s262
    %s265 = sphi 0, %s264
    %s279 = sphi 0, %s265
    %s285 = sphi 0, %s287
    %s288 = sphi 0, %s285
    %s289 = sphi 0, %s288
    %s305 = sphi 0, %s289
  $region4: #{cnn_forward.1} parent=0 // loop_header_branch
    %21 = sbr.rel (%p19) target = $region8
  $region5: #{cnn_forward.1} parent=0 // loop_body
    %s23 = ssub.s32 %s18, 1
    %s24 = ssub.s32 %s18, 2
    %s25 = sadd.s32 %s18, 1
    %s26 = ssub.s32 %s18, %s25
    %p27 = scmp.eq.s32.totalorder %s26, 0
    %s29 = sadd.s32 %s28, 1
    %s30 = scalar_select %p27, %s28, %s29
    %p33 = pneg %p27
    %p34 = scmp.eq.s32.totalorder %s18, 1
    %p35 = por %p33, %p34
    %p36 = scmp.ne.s32.totalorder %s28, %s31
    %p37 = scmp.eq.s32.totalorder %s18, 0
    %p38 = por %p36, %p37
    %p39 = scmp.ne.s32.totalorder %s28, %s31
    %p40 = scmp.eq.s32.totalorder %s23, 1
    %p41 = por %p39, %p40
    %p42 = scmp.ne.s32.totalorder %s31, %s32
    %p43 = scmp.eq.s32.totalorder %s23, 0
    %p44 = por %p42, %p43
    %p45 = scmp.ne.s32.totalorder %s31, %s32
    %p46 = scmp.eq.s32.totalorder %s24, 1
    %p47 = por %p45, %p46
    %p49 = scmp.ne.s32.totalorder %s32, %s48
    %p50 = scmp.eq.s32.totalorder %s24, 0
    %p51 = por %p49, %p50
    %s53 = sadd.s32 %s52, 1
    %p56 = scmp.eq.s32.totalorder %s18, 1
    %p57 = scmp.ne.s32.totalorder %s52, %s54
    %p58 = scmp.eq.s32.totalorder %s18, 0
    %p59 = por %p57, %p58
    %p60 = scmp.ne.s32.totalorder %s52, %s54
    %p61 = scmp.eq.s32.totalorder %s23, 1
    %p62 = por %p60, %p61
    %p63 = scmp.ne.s32.totalorder %s54, %s55
    %p64 = scmp.eq.s32.totalorder %s23, 0
    %p65 = por %p63, %p64
    %p66 = scmp.ne.s32.totalorder %s54, %s55
    %p67 = scmp.eq.s32.totalorder %s24, 1
    %p68 = por %p66, %p67
    %p70 = scmp.ne.s32.totalorder %s55, %s69
    %p71 = scmp.eq.s32.totalorder %s24, 0
    %p72 = por %p70, %p71
    %s74 = sadd.s32 %s73, 1
    %p77 = scmp.eq.s32.totalorder %s18, 1
    %p78 = scmp.ne.s32.totalorder %s73, %s75
    %p79 = scmp.eq.s32.totalorder %s18, 0
    %p80 = por %p78, %p79
    %p81 = scmp.ne.s32.totalorder %s73, %s75
    %p82 = scmp.eq.s32.totalorder %s23, 1
    %p83 = por %p81, %p82
    %p84 = scmp.ne.s32.totalorder %s75, %s76
    %p85 = scmp.eq.s32.totalorder %s23, 0
    %p86 = por %p84, %p85
    %p87 = scmp.ne.s32.totalorder %s75, %s76
    %p88 = scmp.eq.s32.totalorder %s24, 1
    %p89 = por %p87, %p88
    %p91 = scmp.ne.s32.totalorder %s76, %s90
    %p92 = scmp.eq.s32.totalorder %s24, 0
    %p93 = por %p91, %p92
    %s95 = sadd.s32 %s94, 1
    %p98 = scmp.eq.s32.totalorder %s18, 1
    %p99 = scmp.ne.s32.totalorder %s94, %s96
    %p100 = scmp.eq.s32.totalorder %s18, 0
    %p101 = por %p99, %p100
    %p102 = scmp.ne.s32.totalorder %s94, %s96
    %p103 = scmp.eq.s32.totalorder %s23, 1
    %p104 = por %p102, %p103
    %p105 = scmp.ne.s32.totalorder %s96, %s97
    %p106 = scmp.eq.s32.totalorder %s23, 0
    %p107 = por %p105, %p106
    %p108 = scmp.ne.s32.totalorder %s96, %s97
    %p109 = scmp.eq.s32.totalorder %s24, 1
    %p110 = por %p108, %p109
    %p112 = scmp.ne.s32.totalorder %s97, %s111
    %p113 = scmp.eq.s32.totalorder %s24, 0
    %p114 = por %p112, %p113
    %s116 = sadd.s32 %s115, 1
    %p119 = scmp.eq.s32.totalorder %s18, 1
    %p120 = scmp.ne.s32.totalorder %s115, %s117
    %p121 = scmp.eq.s32.totalorder %s18, 0
    %p122 = por %p120, %p121
    %p123 = scmp.ne.s32.totalorder %s115, %s117
    %p124 = scmp.eq.s32.totalorder %s23, 1
    %p125 = por %p123, %p124
    %p126 = scmp.ne.s32.totalorder %s117, %s118
    %p127 = scmp.eq.s32.totalorder %s23, 0
    %p128 = por %p126, %p127
    %p129 = scmp.ne.s32.totalorder %s117, %s118
    %p130 = scmp.eq.s32.totalorder %s24, 1
    %p131 = por %p129, %p130
    %p133 = scmp.ne.s32.totalorder %s118, %s132
    %p134 = scmp.eq.s32.totalorder %s24, 0
    %p135 = por %p133, %p134
    %s137 = sadd.s32 %s136, 1
    %p140 = scmp.eq.s32.totalorder %s18, 1
    %p141 = scmp.ne.s32.totalorder %s136, %s138
    %p142 = scmp.eq.s32.totalorder %s18, 0
    %p143 = por %p141, %p142
    %p144 = scmp.ne.s32.totalorder %s136, %s138
    %p145 = scmp.eq.s32.totalorder %s23, 1
    %p146 = por %p144, %p145
    %p147 = scmp.ne.s32.totalorder %s138, %s139
    %p148 = scmp.eq.s32.totalorder %s23, 0
    %p149 = por %p147, %p148
    %p150 = scmp.ne.s32.totalorder %s138, %s139
    %p151 = scmp.eq.s32.totalorder %s24, 1
    %p152 = por %p150, %p151
    %p154 = scmp.ne.s32.totalorder %s139, %s153
    %p155 = scmp.eq.s32.totalorder %s24, 0
    %p156 = por %p154, %p155
    %s158 = sadd.s32 %s157, 1
    %p161 = scmp.eq.s32.totalorder %s18, 1
    %p162 = scmp.ne.s32.totalorder %s157, %s159
    %p163 = scmp.eq.s32.totalorder %s18, 0
    %p164 = por %p162, %p163
    %p165 = scmp.ne.s32.totalorder %s157, %s159
    %p166 = scmp.eq.s32.totalorder %s23, 1
    %p167 = por %p165, %p166
    %p168 = scmp.ne.s32.totalorder %s159, %s160
    %p169 = scmp.eq.s32.totalorder %s23, 0
    %p170 = por %p168, %p169
    %p171 = scmp.ne.s32.totalorder %s159, %s160
    %p172 = scmp.eq.s32.totalorder %s24, 1
    %p173 = por %p171, %p172
    %p175 = scmp.ne.s32.totalorder %s160, %s174
    %p176 = scmp.eq.s32.totalorder %s24, 0
    %p177 = por %p175, %p176
    %s179 = sadd.s32 %s178, 1
    %p182 = scmp.eq.s32.totalorder %s18, 1
    %p183 = scmp.ne.s32.totalorder %s178, %s180
    %p184 = scmp.eq.s32.totalorder %s18, 0
    %p185 = por %p183, %p184
    %p186 = scmp.ne.s32.totalorder %s178, %s180
    %p187 = scmp.eq.s32.totalorder %s23, 1
    %p188 = por %p186, %p187
    %p189 = scmp.ne.s32.totalorder %s180, %s181
    %p190 = scmp.eq.s32.totalorder %s23, 0
    %p191 = por %p189, %p190
    %p192 = scmp.ne.s32.totalorder %s180, %s181
    %p193 = scmp.eq.s32.totalorder %s24, 1
    %p194 = por %p192, %p193
    %p196 = scmp.ne.s32.totalorder %s181, %s195
    %p197 = scmp.eq.s32.totalorder %s24, 0
    %p198 = por %p196, %p197
    %s200 = sadd.s32 %s199, 1
    %p203 = scmp.eq.s32.totalorder %s18, 1
    %p204 = scmp.ne.s32.totalorder %s199, %s201
    %p205 = scmp.eq.s32.totalorder %s18, 0
    %p206 = por %p204, %p205
    %p207 = scmp.ne.s32.totalorder %s199, %s201
    %p208 = scmp.eq.s32.totalorder %s23, 1
    %p209 = por %p207, %p208
    %p210 = scmp.ne.s32.totalorder %s201, %s202
    %p211 = scmp.eq.s32.totalorder %s23, 0
    %p212 = por %p210, %p211
    %p213 = scmp.ne.s32.totalorder %s201, %s202
    %p214 = scmp.eq.s32.totalorder %s24, 1
    %p215 = por %p213, %p214
    %p217 = scmp.ne.s32.totalorder %s202, %s216
    %p218 = scmp.eq.s32.totalorder %s24, 0
    %p219 = por %p217, %p218
    %s221 = sadd.s32 %s220, 1
    %p224 = scmp.eq.s32.totalorder %s18, 1
    %p225 = scmp.ne.s32.totalorder %s220, %s222
    %p226 = scmp.eq.s32.totalorder %s18, 0
    %p227 = por %p225, %p226
    %p228 = scmp.ne.s32.totalorder %s220, %s222
    %p229 = scmp.eq.s32.totalorder %s23, 1
    %p230 = por %p228, %p229
    %p231 = scmp.ne.s32.totalorder %s222, %s223
    %p232 = scmp.eq.s32.totalorder %s23, 0
    %p233 = por %p231, %p232
    %p234 = scmp.ne.s32.totalorder %s222, %s223
    %p235 = scmp.eq.s32.totalorder %s24, 1
    %p236 = por %p234, %p235
    %p238 = scmp.ne.s32.totalorder %s223, %s237
    %p239 = scmp.eq.s32.totalorder %s24, 0
    %p240 = por %p238, %p239
    %s242 = sadd.s32 %s241, 1
    %p245 = scmp.eq.s32.totalorder %s18, 1
    %p246 = scmp.ne.s32.totalorder %s241, %s243
    %p247 = scmp.eq.s32.totalorder %s18, 0
    %p248 = por %p246, %p247
    %p249 = scmp.ne.s32.totalorder %s241, %s243
    %p250 = scmp.eq.s32.totalorder %s23, 1
    %p251 = por %p249, %p250
    %p252 = scmp.ne.s32.totalorder %s243, %s244
    %p253 = scmp.eq.s32.totalorder %s23, 0
    %p254 = por %p252, %p253
    %p255 = scmp.ne.s32.totalorder %s243, %s244
    %p256 = scmp.eq.s32.totalorder %s24, 1
    %p257 = por %p255, %p256
    %p259 = scmp.ne.s32.totalorder %s244, %s258
    %p260 = scmp.eq.s32.totalorder %s24, 0
    %p261 = por %p259, %p260
    %s263 = sadd.s32 %s262, 1
    %p266 = scmp.eq.s32.totalorder %s18, 1
    %p267 = scmp.ne.s32.totalorder %s262, %s264
    %p268 = scmp.eq.s32.totalorder %s18, 0
    %p269 = por %p267, %p268
    %p270 = scmp.ne.s32.totalorder %s262, %s264
    %p271 = scmp.eq.s32.totalorder %s23, 1
    %p272 = por %p270, %p271
    %p273 = scmp.ne.s32.totalorder %s264, %s265
    %p274 = scmp.eq.s32.totalorder %s23, 0
    %p275 = por %p273, %p274
    %p276 = scmp.ne.s32.totalorder %s264, %s265
    %p277 = scmp.eq.s32.totalorder %s24, 1
    %p278 = por %p276, %p277
    %p280 = scmp.ne.s32.totalorder %s265, %s279
    %p281 = scmp.eq.s32.totalorder %s24, 0
    %p282 = por %p280, %p281
    %s283 = ssub.s32 %s18, %s25
    %p284 = scmp.eq.s32.totalorder %s283, 0
    %s286 = sadd.s32 %s285, 1
    %s287 = scalar_select %p284, %s285, %s286
    %p290 = pneg %p284
    %p291 = scmp.eq.s32.totalorder %s18, 1
    %p292 = por %p290, %p291
    %p293 = scmp.ne.s32.totalorder %s285, %s288
    %p294 = scmp.eq.s32.totalorder %s18, 0
    %p295 = por %p293, %p294
    %p296 = scmp.ne.s32.totalorder %s285, %s288
    %p297 = scmp.eq.s32.totalorder %s23, 1
    %p298 = por %p296, %p297
    %p299 = scmp.ne.s32.totalorder %s288, %s289
    %p300 = scmp.eq.s32.totalorder %s23, 0
    %p301 = por %p299, %p300
    %p302 = scmp.ne.s32.totalorder %s288, %s289
    %p303 = scmp.eq.s32.totalorder %s24, 1
    %p304 = por %p302, %p303
    %p306 = scmp.ne.s32.totalorder %s289, %s305
    %p307 = scmp.eq.s32.totalorder %s24, 0
    %p308 = por %p306, %p307
    %p309 = scmp.le.s32.totalorder 1, %s18
    %p310 = scmp.lt.s32.totalorder %s18, 3
    %p311 = pnand %p309, %p310
    %p312 = pneg %p311
    // Predicated region
    $region9: #{cnn_forward.1} parent=5 // pred_check
      _
    $region10: #{cnn_forward.1} parent=5 // pred_check_branch
      %314 = sbr.rel (%p311) target = $region12
    $region11: #{cnn_forward.1} parent=5 // pred_region
      %s315 = ssub.s32 %s18, 1
      // Predicated region
      $region13: #{cnn_forward.1} parent=11 // pred_check
        %p316 = pneg %p65
      $region14: #{cnn_forward.1} parent=11 // pred_check_branch
        %318 = sbr.rel (%p316) target = $region16
      $region15: #{cnn_forward.1} parent=11 // pred_region
        _
      $region16: #{cnn_forward.1} parent=11 // pred_fallthru
        _
      // Predicated region
      $region17: #{cnn_forward.1} parent=11 // pred_check
        %p319 = pneg %p86
      $region18: #{cnn_forward.1} parent=11 // pred_check_branch
        %321 = sbr.rel (%p319) target = $region20
      $region19: #{cnn_forward.1} parent=11 // pred_region
        _
      $region20: #{cnn_forward.1} parent=11 // pred_fallthru
        _
      // Predicated region
      $region21: #{cnn_forward.1} parent=11 // pred_check
        %p322 = pneg %p107
      $region22: #{cnn_forward.1} parent=11 // pred_check_branch
        %324 = sbr.rel (%p322) target = $region24
      $region23: #{cnn_forward.1} parent=11 // pred_region
        _
      $region24: #{cnn_forward.1} parent=11 // pred_fallthru
        _
      // Predicated region
      $region25: #{cnn_forward.1} parent=11 // pred_check
        %p325 = pneg %p128
      $region26: #{cnn_forward.1} parent=11 // pred_check_branch
        %327 = sbr.rel (%p325) target = $region28
      $region27: #{cnn_forward.1} parent=11 // pred_region
        _
      $region28: #{cnn_forward.1} parent=11 // pred_fallthru
        _
      // Predicated region
      $region29: #{cnn_forward.1} parent=11 // pred_check
        %p328 = pneg %p149
      $region30: #{cnn_forward.1} parent=11 // pred_check_branch
        %330 = sbr.rel (%p328) target = $region32
      $region31: #{cnn_forward.1} parent=11 // pred_region
        _
      $region32: #{cnn_forward.1} parent=11 // pred_fallthru
        _
      // Predicated region
      $region33: #{cnn_forward.1} parent=11 // pred_check
        %p331 = pneg %p170
      $region34: #{cnn_forward.1} parent=11 // pred_check_branch
        %333 = sbr.rel (%p331) target = $region36
      $region35: #{cnn_forward.1} parent=11 // pred_region
        _
      $region36: #{cnn_forward.1} parent=11 // pred_fallthru
        _
      // Predicated region
      $region37: #{cnn_forward.1} parent=11 // pred_check
        %p334 = pneg %p191
      $region38: #{cnn_forward.1} parent=11 // pred_check_branch
        %336 = sbr.rel (%p334) target = $region40
      $region39: #{cnn_forward.1} parent=11 // pred_region
        _
      $region40: #{cnn_forward.1} parent=11 // pred_fallthru
        _
      // Predicated region
      $region41: #{cnn_forward.1} parent=11 // pred_check
        %p337 = pneg %p212
      $region42: #{cnn_forward.1} parent=11 // pred_check_branch
        %339 = sbr.rel (%p337) target = $region44
      $region43: #{cnn_forward.1} parent=11 // pred_region
        _
      $region44: #{cnn_forward.1} parent=11 // pred_fallthru
        _
      // Predicated region
      $region45: #{cnn_forward.1} parent=11 // pred_check
        %p340 = pneg %p233
      $region46: #{cnn_forward.1} parent=11 // pred_check_branch
        %342 = sbr.rel (%p340) target = $region48
      $region47: #{cnn_forward.1} parent=11 // pred_region
        _
      $region48: #{cnn_forward.1} parent=11 // pred_fallthru
        _
      // Predicated region
      $region49: #{cnn_forward.1} parent=11 // pred_check
        %p343 = pneg %p254
      $region50: #{cnn_forward.1} parent=11 // pred_check_branch
        %345 = sbr.rel (%p343) target = $region52
      $region51: #{cnn_forward.1} parent=11 // pred_region
        _
      $region52: #{cnn_forward.1} parent=11 // pred_fallthru
        _
      // Predicated region
      $region53: #{cnn_forward.1} parent=11 // pred_check
        %p346 = pneg %p275
      $region54: #{cnn_forward.1} parent=11 // pred_check_branch
        %348 = sbr.rel (%p346) target = $region56
      $region55: #{cnn_forward.1} parent=11 // pred_region
        _
      $region56: #{cnn_forward.1} parent=11 // pred_fallthru
        _
    $region12: #{cnn_forward.1} parent=5 // pred_fallthru
      _
    %p349 = scmp.lt.s32.totalorder %s18, 2
    // Predicated region
    $region57: #{cnn_forward.1} parent=5 // pred_check
      %p350 = pneg %p349
    $region58: #{cnn_forward.1} parent=5 // pred_check_branch
      %352 = sbr.rel (%p350) target = $region60
    $region59: #{cnn_forward.1} parent=5 // pred_region
      // Predicated region
      $region61: #{cnn_forward.1} parent=59 // pred_check
        %p353 = pneg %p38
      $region62: #{cnn_forward.1} parent=59 // pred_check_branch
        %355 = sbr.rel (%p353) target = $region64
      $region63: #{cnn_forward.1} parent=59 // pred_region
        %p356 = scmp.lt.s32.totalorder %s18, 1
        %s357 = scalar_select %p356, %s18, 1
        %s358 = smul.addr %s357, 4
        %s359 = scalar_lea.vmem %s0, %s358
      $region64: #{cnn_forward.1} parent=59 // pred_fallthru
        _
    $region60: #{cnn_forward.1} parent=5 // pred_fallthru
      _
    %p360 = scmp.le.s32.totalorder 1, %s18
    %p361 = scmp.lt.s32.totalorder %s18, 3
    %p362 = pnand %p360, %p361
    %p363 = pneg %p362
    // Predicated region
    $region65: #{cnn_forward.1} parent=5 // pred_check
      _
    $region66: #{cnn_forward.1} parent=5 // pred_check_branch
      %365 = sbr.rel (%p362) target = $region68
    $region67: #{cnn_forward.1} parent=5 // pred_region
      %s366 = ssub.s32 %s18, 1
      %p367 = scmp.lt.s32.totalorder %s23, 1
      %s368 = scalar_select %p367, %s23, 1
      %s369 = smul.addr %s368, 4
      %s370 = scalar_lea.vmem %s0, %s369
      %p371 = pneg %p44
      %p372 = pneg %p41
      %p373 = pneg %p65
      %p374 = pneg %p62
      %p375 = pneg %p86
      %p376 = pneg %p83
      %p377 = pneg %p107
      %p378 = pneg %p104
      %p379 = pneg %p128
      %p380 = pneg %p125
      %p381 = pneg %p149
      %p382 = pneg %p146
      %p383 = pneg %p170
      %p384 = pneg %p167
      %p385 = pneg %p191
      %p386 = pneg %p188
      %p387 = pneg %p212
      %p388 = pneg %p209
      %p389 = pneg %p233
      %p390 = pneg %p230
      %p391 = pneg %p254
      %p392 = pneg %p251
      %p393 = pneg %p275
      %p394 = pneg %p272
      %p395 = pneg %p301
      %p396 = pneg %p298
      %p397 = scmp.lt.s32.totalorder %s23, 1
      %s398 = scalar_select %p397, %s23, 1
      %s399 = smul.addr %s398, 4
      %s400 = scalar_lea.vmem %s12, %s399
      %p401 = scmp.lt.s32.totalorder %s23, 1
      %s402 = scalar_select %p401, %s23, 1
      %s403 = smul.addr %s402, 4
      %s404 = scalar_lea.vmem %s0, %s403
      %p405 = scmp.lt.s32.totalorder %s23, 1
      %s406 = scalar_select %p405, %s23, 1
      %s407 = smul.addr %s406, 4
      %s408 = scalar_lea.vmem %s12, %s407
      %v409 = vld [vmem:[%s404] sm:$0xf]
      %v410 = vld [vmem:[%s1] sm:$0xff]
      %s411 = scalar_lea.vmem %s1, 8
      %v412 = vld [vmem:[%s411] sm:$0xff]
      %414 = vrot.lane.b32.xlu0 %v409, 127
      %v415 = vpop.permute.xlu0 %414
      %vm417 = vcmask 31744
      %v419 = vsel %vm417, %v412, 0
      %vm421 = vcmask 1043456
      %v423 = vsel %vm421, %v415, 0
      %425 = vmatpush.msra.mxu0 0.0
      %426 = vmatpush.msra.mxu0 0.0
      %427 = vmatpush.msra.mxu0 0.0
      %428 = vmatpush.msra.mxu0 0.0
      %429 = vmatpush.msra.mxu0 0.0
      %430 = vmatpush.msra.mxu0 0.0
      %431 = vmatpush.msra.mxu0 0.0
      %432 = vmatpush.msra.mxu0 0.0
      %433 = vmatpush.msra.mxu0 0.0
      %434 = vmatpush.msra.mxu0 0.0
      %435 = vmatpush.msra.mxu0 0.0
      %436 = vmatpush.msra.mxu0 0.0
      %437 = vmatpush.msra.mxu0 0.0
      %438 = vmatpush.msra.mxu0 0.0
      %439 = vmatpush.msra.mxu0 0.0
      %440 = vmatpush.msra.mxu0 %v423
      %441 = vmatmul.f32.gmra.mxu0 %v419
      %v442 = vpop.f32.mrf.mxu0
      %v443 = vadd.f32 0.0, %v442
      %444 = vdwg.mxu0
      %v446 = vsel %vm417, %v410, 0
      %v448 = vsel %vm421, %v409, 0
      %450 = vmatpush.msra.mxu0 0.0
      %451 = vmatpush.msra.mxu0 0.0
      %452 = vmatpush.msra.mxu0 0.0
      %453 = vmatpush.msra.mxu0 0.0
      %454 = vmatpush.msra.mxu0 0.0
      %455 = vmatpush.msra.mxu0 0.0
      %456 = vmatpush.msra.mxu0 0.0
      %457 = vmatpush.msra.mxu0 0.0
      %458 = vmatpush.msra.mxu0 0.0
      %459 = vmatpush.msra.mxu0 0.0
      %460 = vmatpush.msra.mxu0 0.0
      %461 = vmatpush.msra.mxu0 0.0
      %462 = vmatpush.msra.mxu0 0.0
      %463 = vmatpush.msra.mxu0 0.0
      %464 = vmatpush.msra.mxu0 0.0
      %465 = vmatpush.msra.mxu0 %v448
      %466 = vmatmul.f32.gmra.mxu0 %v446
      %v467 = vpop.f32.mrf.mxu0
      %v468 = vadd.f32 %v443, %v467
      %469 = vdwg.mxu0
      %s470 = scalar_lea.vmem %s1, 16
      %v471 = vld [vmem:[%s470] sm:$0xff]
      %472 = vrot.lane.b32.xlu0 %v409, 126
      %v473 = vpop.permute.xlu0 %472
      %v476 = vsel %vm417, %v471, 0
      %v479 = vsel %vm421, %v473, 0
      %481 = vmatpush.msra.mxu0 0.0
      %482 = vmatpush.msra.mxu0 0.0
      %483 = vmatpush.msra.mxu0 0.0
      %484 = vmatpush.msra.mxu0 0.0
      %485 = vmatpush.msra.mxu0 0.0
      %486 = vmatpush.msra.mxu0 0.0
      %487 = vmatpush.msra.mxu0 0.0
      %488 = vmatpush.msra.mxu0 0.0
      %489 = vmatpush.msra.mxu0 0.0
      %490 = vmatpush.msra.mxu0 0.0
      %491 = vmatpush.msra.mxu0 0.0
      %492 = vmatpush.msra.mxu0 0.0
      %493 = vmatpush.msra.mxu0 0.0
      %494 = vmatpush.msra.mxu0 0.0
      %495 = vmatpush.msra.mxu0 0.0
      %496 = vmatpush.msra.mxu0 %v479
      %497 = vmatmul.f32.gmra.mxu0 %v476
      %v498 = vpop.f32.mrf.mxu0
      %v499 = vadd.f32 0.0, %v498
      %500 = vdwg.mxu0
      %v501 = vadd.f32 %v468, %v499
      %v502 = vld [vmem:[%s2] sm:$0xff]
      %504 = vset.pattern.permute.xlu0 0
      %505 = vperm.xlu0 %504, %v502
      %v506 = vpop.permute.xlu0 %505
      %v508 = vadd.f32 %v501, %v506
      %v509 = vmax.f32 %v508, 0.0
      %511 = vrot.lane.b32.xlu0 %v509, 127
      %v512 = vpop.permute.xlu0 %511
      %v514 = vmax.f32 %v509, %v512
      %v515 = vld [vmem:[%s3] sm:$0xff]
      %v516 = vld [vmem:[%s3 + $0x8] sm:$0xff]
      %v517 = vld [vmem:[%s3 + $0x10] sm:$0xff]
      %v518 = vld [vmem:[%s3 + $0x18] sm:$0xff]
      %v519 = vld [vmem:[%s3 + $0x20] sm:$0xff]
      %v520 = vld [vmem:[%s3 + $0x28] sm:$0xff]
      %v521 = vld [vmem:[%s3 + $0x30] sm:$0xff]
      %v522 = vld [vmem:[%s3 + $0x38] sm:$0xff]
      %v523 = vld [vmem:[%s3 + $0x40] sm:$0xff]
      %v524 = vld [vmem:[%s3 + $0x48] sm:$0xff]
      %v525 = vld [vmem:[%s3 + $0x50] sm:$0xff]
      %v526 = vld [vmem:[%s3 + $0x58] sm:$0xff]
      %v527 = vld [vmem:[%s3 + $0x60] sm:$0xff]
      %v528 = vld [vmem:[%s3 + $0x68] sm:$0xff]
      %v529 = vld [vmem:[%s3 + $0x70] sm:$0xff]
      %v530 = vld [vmem:[%s3 + $0x78] sm:$0xff]
      %531 = vmatpush.msra.mxu0 %v530
      %532 = vmatpush.msra.mxu0 %v529
      %533 = vmatpush.msra.mxu0 %v528
      %534 = vmatpush.msra.mxu0 %v527
      %535 = vmatpush.msra.mxu0 %v526
      %536 = vmatpush.msra.mxu0 %v525
      %537 = vmatpush.msra.mxu0 %v524
      %538 = vmatpush.msra.mxu0 %v523
      %539 = vmatpush.msra.mxu0 %v522
      %540 = vmatpush.msra.mxu0 %v521
      %541 = vmatpush.msra.mxu0 %v520
      %542 = vmatpush.msra.mxu0 %v519
      %543 = vmatpush.msra.mxu0 %v518
      %544 = vmatpush.msra.mxu0 %v517
      %545 = vmatpush.msra.mxu0 %v516
      %546 = vmatpush.msra.mxu0 %v515
      %547 = vmatmul.f32.gmra.mxu0 %v514
      %v548 = vpop.f32.mrf.mxu0
      %v549 = vadd.f32 0.0, %v548
      %550 = vdwg.mxu0
      %v551 = vld [vmem:[%s4] sm:$0xff]
      %s552 = scalar_lea.vmem %s4, 8
      %v553 = vld [vmem:[%s552] sm:$0xff]
      %555 = vrot.lane.b32.xlu0 %v549, 127
      %v556 = vpop.permute.xlu0 %555
      %558 = vrot.lane.b32.xlu0 %v549, 59
      %v559 = vpop.permute.xlu0 %558
      %vm561 = vcmask 482304
      %v562 = vsel %vm561, %v556, %v559
      %vm563 = vcmask 64512
      %v565 = vsel %vm563, %v553, 0
      %567 = vmatpush.msra.mxu0 0.0
      %568 = vmatpush.msra.mxu0 0.0
      %569 = vmatpush.msra.mxu0 0.0
      %570 = vmatpush.msra.mxu0 0.0
      %571 = vmatpush.msra.mxu0 0.0
      %572 = vmatpush.msra.mxu0 0.0
      %573 = vmatpush.msra.mxu0 0.0
      %574 = vmatpush.msra.mxu0 0.0
      %575 = vmatpush.msra.mxu0 0.0
      %576 = vmatpush.msra.mxu0 0.0
      %577 = vmatpush.msra.mxu0 0.0
      %578 = vmatpush.msra.mxu0 0.0
      %579 = vmatpush.msra.mxu0 0.0
      %580 = vmatpush.msra.mxu0 0.0
      %581 = vmatpush.msra.mxu0 0.0
      %582 = vmatpush.msra.mxu0 %v562
      %583 = vmatmul.f32.gmra.mxu0 %v565
      %v584 = vpop.f32.mrf.mxu0
      %v585 = vadd.f32 0.0, %v584
      %586 = vdwg.mxu0
      %v588 = vsel %vm563, %v551, 0
      %590 = vmatpush.msra.mxu0 0.0
      %591 = vmatpush.msra.mxu0 0.0
      %592 = vmatpush.msra.mxu0 0.0
      %593 = vmatpush.msra.mxu0 0.0
      %594 = vmatpush.msra.mxu0 0.0
      %595 = vmatpush.msra.mxu0 0.0
      %596 = vmatpush.msra.mxu0 0.0
      %597 = vmatpush.msra.mxu0 0.0
      %598 = vmatpush.msra.mxu0 0.0
      %599 = vmatpush.msra.mxu0 0.0
      %600 = vmatpush.msra.mxu0 0.0
      %601 = vmatpush.msra.mxu0 0.0
      %602 = vmatpush.msra.mxu0 0.0
      %603 = vmatpush.msra.mxu0 0.0
      %604 = vmatpush.msra.mxu0 0.0
      %605 = vmatpush.msra.mxu0 %v549
      %606 = vmatmul.f32.gmra.mxu0 %v588
      %v607 = vpop.f32.mrf.mxu0
      %v608 = vadd.f32 %v585, %v607
      %609 = vdwg.mxu0
      %s610 = scalar_lea.vmem %s4, 16
      %v611 = vld [vmem:[%s610] sm:$0xff]
      %612 = vrot.lane.b32.xlu0 %v549, 126
      %v613 = vpop.permute.xlu0 %612
      %615 = vrot.lane.b32.xlu0 %v549, 58
      %v616 = vpop.permute.xlu0 %615
      %vm618 = vcmask 474112
      %v619 = vsel %vm618, %v613, %v616
      %v621 = vsel %vm563, %v611, 0
      %623 = vmatpush.msra.mxu0 0.0
      %624 = vmatpush.msra.mxu0 0.0
      %625 = vmatpush.msra.mxu0 0.0
      %626 = vmatpush.msra.mxu0 0.0
      %627 = vmatpush.msra.mxu0 0.0
      %628 = vmatpush.msra.mxu0 0.0
      %629 = vmatpush.msra.mxu0 0.0
      %630 = vmatpush.msra.mxu0 0.0
      %631 = vmatpush.msra.mxu0 0.0
      %632 = vmatpush.msra.mxu0 0.0
      %633 = vmatpush.msra.mxu0 0.0
      %634 = vmatpush.msra.mxu0 0.0
      %635 = vmatpush.msra.mxu0 0.0
      %636 = vmatpush.msra.mxu0 0.0
      %637 = vmatpush.msra.mxu0 0.0
      %638 = vmatpush.msra.mxu0 %v619
      %639 = vmatmul.f32.gmra.mxu0 %v621
      %v640 = vpop.f32.mrf.mxu0
      %v641 = vadd.f32 0.0, %v640
      %642 = vdwg.mxu0
      %v643 = vadd.f32 %v608, %v641
      %v644 = vld [vmem:[%s5] sm:$0xff]
      %646 = vset.pattern.permute.xlu0 0
      %647 = vperm.xlu0 %646, %v644
      %v648 = vpop.permute.xlu0 %647
      %v650 = vadd.f32 %v643, %v648
      %v651 = vmax.f32 %v650, 0.0
      %653 = vrot.lane.b32.xlu0 %v651, 127
      %v654 = vpop.permute.xlu0 %653
      %656 = vrot.lane.b32.xlu0 %v651, 59
      %v657 = vpop.permute.xlu0 %656
      %v659 = vsel %vm561, %v654, %v657
      %v660 = vmax.f32 %v651, %v659
      %v661 = vld [vmem:[%s6] sm:$0xff]
      %v662 = vld [vmem:[%s6 + $0x8] sm:$0xff]
      %v663 = vld [vmem:[%s6 + $0x10] sm:$0xff]
      %v664 = vld [vmem:[%s6 + $0x18] sm:$0xff]
      %v665 = vld [vmem:[%s6 + $0x20] sm:$0xff]
      %v666 = vld [vmem:[%s6 + $0x28] sm:$0xff]
      %v667 = vld [vmem:[%s6 + $0x30] sm:$0xff]
      %v668 = vld [vmem:[%s6 + $0x38] sm:$0xf]
      %vm669 = vcmask 490496
      %v671 = vsel %vm669, %v660, 0
      %v674 = vsel %vm421, %v668, 0
      %676 = vmatpush.msra.mxu0 0.0
      %677 = vmatpush.msra.mxu0 0.0
      %678 = vmatpush.msra.mxu0 0.0
      %679 = vmatpush.msra.mxu0 0.0
      %680 = vmatpush.msra.mxu0 0.0
      %681 = vmatpush.msra.mxu0 0.0
      %682 = vmatpush.msra.mxu0 0.0
      %683 = vmatpush.msra.mxu0 0.0
      %684 = vmatpush.msra.mxu0 %v674
      %685 = vmatpush.msra.mxu0 %v667
      %686 = vmatpush.msra.mxu0 %v666
      %687 = vmatpush.msra.mxu0 %v665
      %688 = vmatpush.msra.mxu0 %v664
      %689 = vmatpush.msra.mxu0 %v663
      %690 = vmatpush.msra.mxu0 %v662
      %691 = vmatpush.msra.mxu0 %v661
      %692 = vmatmul.f32.gmra.mxu0 %v671
      %v693 = vpop.f32.mrf.mxu0
      %v694 = vadd.f32 0.0, %v693
      %695 = vdwg.mxu0
      %v696 = vld [vmem:[%s7] sm:$0xff]
      %v697 = vld [vmem:[%s7 + $0x8] sm:$0xff]
      %v698 = vld [vmem:[%s7 + $0x10] sm:$0xf]
      %s699 = scalar_lea.vmem %s7, 24
      %v700 = vld [vmem:[%s699] sm:$0xff]
      %v701 = vld [vmem:[%s699 + $0x8] sm:$0xff]
      %v702 = vld [vmem:[%s699 + $0x10] sm:$0xf]
      %704 = vrot.lane.b32.xlu0 %v694, 127
      %v705 = vpop.permute.xlu0 %704
      %707 = vrot.lane.b32.xlu0 %v694, 23
      %v708 = vpop.permute.xlu0 %707
      %vm710 = vcmask 187392
      %v711 = vsel %vm710, %v705, %v708
      %v713 = vsel %vm563, %v700, 0
      %v716 = vsel %vm563, %v701, 0
      %v719 = vsel %vm563, %v702, 0
      %721 = vmatpush.msra.mxu0 0.0
      %722 = vmatpush.msra.mxu0 0.0
      %723 = vmatpush.msra.mxu0 0.0
      %724 = vmatpush.msra.mxu0 0.0
      %725 = vmatpush.msra.mxu0 0.0
      %726 = vmatpush.msra.mxu0 0.0
      %727 = vmatpush.msra.mxu0 0.0
      %728 = vmatpush.msra.mxu0 0.0
      %729 = vmatpush.msra.mxu0 0.0
      %730 = vmatpush.msra.mxu0 0.0
      %731 = vmatpush.msra.mxu0 0.0
      %732 = vmatpush.msra.mxu0 0.0
      %733 = vmatpush.msra.mxu0 0.0
      %734 = vmatpush.msra.mxu0 0.0
      %735 = vmatpush.msra.mxu0 0.0
      %736 = vmatpush.msra.mxu0 %v711
      %737 = vmatmul.f32.gmra.mxu0 %v713
      %v738 = vpop.f32.mrf.mxu0
      %v739 = vadd.f32 0.0, %v738
      %740 = vmatmul.f32.gmra.mxu0 %v716
      %v741 = vpop.f32.mrf.mxu0
      %v742 = vadd.f32 0.0, %v741
      %743 = vmatmul.f32.gmra.mxu0 %v719
      %v744 = vpop.f32.mrf.mxu0
      %v745 = vadd.f32 0.0, %v744
      %746 = vdwg.mxu0
      %v748 = vsel %vm563, %v696, 0
      %v751 = vsel %vm563, %v697, 0
      %v754 = vsel %vm563, %v698, 0
      %756 = vmatpush.msra.mxu0 0.0
      %757 = vmatpush.msra.mxu0 0.0
      %758 = vmatpush.msra.mxu0 0.0
      %759 = vmatpush.msra.mxu0 0.0
      %760 = vmatpush.msra.mxu0 0.0
      %761 = vmatpush.msra.mxu0 0.0
      %762 = vmatpush.msra.mxu0 0.0
      %763 = vmatpush.msra.mxu0 0.0
      %764 = vmatpush.msra.mxu0 0.0
      %765 = vmatpush.msra.mxu0 0.0
      %766 = vmatpush.msra.mxu0 0.0
      %767 = vmatpush.msra.mxu0 0.0
      %768 = vmatpush.msra.mxu0 0.0
      %769 = vmatpush.msra.mxu0 0.0
      %770 = vmatpush.msra.mxu0 0.0
      %771 = vmatpush.msra.mxu0 %v694
      %772 = vmatmul.f32.gmra.mxu0 %v748
      %v773 = vpop.f32.mrf.mxu0
      %v774 = vadd.f32 %v739, %v773
      %775 = vmatmul.f32.gmra.mxu0 %v751
      %v776 = vpop.f32.mrf.mxu0
      %v777 = vadd.f32 %v742, %v776
      %778 = vmatmul.f32.gmra.mxu0 %v754
      %v779 = vpop.f32.mrf.mxu0
      %v780 = vadd.f32 %v745, %v779
      %781 = vdwg.mxu0
      %s782 = scalar_lea.vmem %s7, 48
      %v783 = vld [vmem:[%s782] sm:$0xff]
      %v784 = vld [vmem:[%s782 + $0x8] sm:$0xff]
      %v785 = vld [vmem:[%s782 + $0x10] sm:$0xf]
      %786 = vrot.lane.b32.xlu0 %v694, 126
      %v787 = vpop.permute.xlu0 %786
      %789 = vrot.lane.b32.xlu0 %v694, 22
      %v790 = vpop.permute.xlu0 %789
      %vm792 = vcmask 179200
      %v793 = vsel %vm792, %v787, %v790
      %v795 = vsel %vm563, %v783, 0
      %v798 = vsel %vm563, %v784, 0
      %v801 = vsel %vm563, %v785, 0
      %803 = vmatpush.msra.mxu0 0.0
      %804 = vmatpush.msra.mxu0 0.0
      %805 = vmatpush.msra.mxu0 0.0
      %806 = vmatpush.msra.mxu0 0.0
      %807 = vmatpush.msra.mxu0 0.0
      %808 = vmatpush.msra.mxu0 0.0
      %809 = vmatpush.msra.mxu0 0.0
      %810 = vmatpush.msra.mxu0 0.0
      %811 = vmatpush.msra.mxu0 0.0
      %812 = vmatpush.msra.mxu0 0.0
      %813 = vmatpush.msra.mxu0 0.0
      %814 = vmatpush.msra.mxu0 0.0
      %815 = vmatpush.msra.mxu0 0.0
      %816 = vmatpush.msra.mxu0 0.0
      %817 = vmatpush.msra.mxu0 0.0
      %818 = vmatpush.msra.mxu0 %v793
      %819 = vmatmul.f32.gmra.mxu0 %v795
      %v820 = vpop.f32.mrf.mxu0
      %v821 = vadd.f32 0.0, %v820
      %822 = vmatmul.f32.gmra.mxu0 %v798
      %v823 = vpop.f32.mrf.mxu0
      %v824 = vadd.f32 0.0, %v823
      %825 = vmatmul.f32.gmra.mxu0 %v801
      %v826 = vpop.f32.mrf.mxu0
      %v827 = vadd.f32 0.0, %v826
      %828 = vdwg.mxu0
      %v829 = vadd.f32 %v774, %v821
      %v830 = vadd.f32 %v777, %v824
      %v831 = vadd.f32 %v780, %v827
      %s832 = scalar_lea.vmem %s7, 72
      %v833 = vld [vmem:[%s832] sm:$0xff]
      %v834 = vld [vmem:[%s832 + $0x8] sm:$0xff]
      %v835 = vld [vmem:[%s832 + $0x10] sm:$0xf]
      %836 = vrot.lane.b32.xlu0 %v694, 125
      %v837 = vpop.permute.xlu0 %836
      %839 = vrot.lane.b32.xlu0 %v694, 21
      %v840 = vpop.permute.xlu0 %839
      %vm842 = vcmask 171008
      %v843 = vsel %vm842, %v837, %v840
      %v845 = vsel %vm563, %v833, 0
      %v848 = vsel %vm563, %v834, 0
      %v851 = vsel %vm563, %v835, 0
      %853 = vmatpush.msra.mxu0 0.0
      %854 = vmatpush.msra.mxu0 0.0
      %855 = vmatpush.msra.mxu0 0.0
      %856 = vmatpush.msra.mxu0 0.0
      %857 = vmatpush.msra.mxu0 0.0
      %858 = vmatpush.msra.mxu0 0.0
      %859 = vmatpush.msra.mxu0 0.0
      %860 = vmatpush.msra.mxu0 0.0
      %861 = vmatpush.msra.mxu0 0.0
      %862 = vmatpush.msra.mxu0 0.0
      %863 = vmatpush.msra.mxu0 0.0
      %864 = vmatpush.msra.mxu0 0.0
      %865 = vmatpush.msra.mxu0 0.0
      %866 = vmatpush.msra.mxu0 0.0
      %867 = vmatpush.msra.mxu0 0.0
      %868 = vmatpush.msra.mxu0 %v843
      %869 = vmatmul.f32.gmra.mxu0 %v845
      %v870 = vpop.f32.mrf.mxu0
      %v871 = vadd.f32 0.0, %v870
      %872 = vmatmul.f32.gmra.mxu0 %v848
      %v873 = vpop.f32.mrf.mxu0
      %v874 = vadd.f32 0.0, %v873
      %875 = vmatmul.f32.gmra.mxu0 %v851
      %v876 = vpop.f32.mrf.mxu0
      %v877 = vadd.f32 0.0, %v876
      %878 = vdwg.mxu0
      %v879 = vadd.f32 %v829, %v871
      %v880 = vadd.f32 %v830, %v874
      %v881 = vadd.f32 %v831, %v877
      %s882 = scalar_lea.vmem %s7, 96
      %v883 = vld [vmem:[%s882] sm:$0xff]
      %v884 = vld [vmem:[%s882 + $0x8] sm:$0xff]
      %v885 = vld [vmem:[%s882 + $0x10] sm:$0xf]
      %886 = vrot.lane.b32.xlu0 %v694, 124
      %v887 = vpop.permute.xlu0 %886
      %889 = vrot.lane.b32.xlu0 %v694, 20
      %v890 = vpop.permute.xlu0 %889
      %vm892 = vcmask 162816
      %v893 = vsel %vm892, %v887, %v890
      %v895 = vsel %vm563, %v883, 0
      %v898 = vsel %vm563, %v884, 0
      %v901 = vsel %vm563, %v885, 0
      %903 = vmatpush.msra.mxu0 0.0
      %904 = vmatpush.msra.mxu0 0.0
      %905 = vmatpush.msra.mxu0 0.0
      %906 = vmatpush.msra.mxu0 0.0
      %907 = vmatpush.msra.mxu0 0.0
      %908 = vmatpush.msra.mxu0 0.0
      %909 = vmatpush.msra.mxu0 0.0
      %910 = vmatpush.msra.mxu0 0.0
      %911 = vmatpush.msra.mxu0 0.0
      %912 = vmatpush.msra.mxu0 0.0
      %913 = vmatpush.msra.mxu0 0.0
      %914 = vmatpush.msra.mxu0 0.0
      %915 = vmatpush.msra.mxu0 0.0
      %916 = vmatpush.msra.mxu0 0.0
      %917 = vmatpush.msra.mxu0 0.0
      %918 = vmatpush.msra.mxu0 %v893
      %919 = vmatmul.f32.gmra.mxu0 %v895
      %v920 = vpop.f32.mrf.mxu0
      %v921 = vadd.f32 0.0, %v920
      %922 = vmatmul.f32.gmra.mxu0 %v898
      %v923 = vpop.f32.mrf.mxu0
      %v924 = vadd.f32 0.0, %v923
      %925 = vmatmul.f32.gmra.mxu0 %v901
      %v926 = vpop.f32.mrf.mxu0
      %v927 = vadd.f32 0.0, %v926
      %928 = vdwg.mxu0
      %v929 = vadd.f32 %v879, %v921
      %v930 = vadd.f32 %v880, %v924
      %v931 = vadd.f32 %v881, %v927
      %s932 = scalar_lea.vmem %s7, 120
      %v933 = vld [vmem:[%s932] sm:$0xff]
      %v934 = vld [vmem:[%s932 + $0x8] sm:$0xff]
      %v935 = vld [vmem:[%s932 + $0x10] sm:$0xf]
      %936 = vrot.lane.b32.xlu0 %v694, 123
      %v937 = vpop.permute.xlu0 %936
      %939 = vrot.lane.b32.xlu0 %v694, 19
      %v940 = vpop.permute.xlu0 %939
      %vm942 = vcmask 154624
      %v943 = vsel %vm942, %v937, %v940
      %v945 = vsel %vm563, %v933, 0
      %v948 = vsel %vm563, %v934, 0
      %v951 = vsel %vm563, %v935, 0
      %953 = vmatpush.msra.mxu0 0.0
      %954 = vmatpush.msra.mxu0 0.0
      %955 = vmatpush.msra.mxu0 0.0
      %956 = vmatpush.msra.mxu0 0.0
      %957 = vmatpush.msra.mxu0 0.0
      %958 = vmatpush.msra.mxu0 0.0
      %959 = vmatpush.msra.mxu0 0.0
      %960 = vmatpush.msra.mxu0 0.0
      %961 = vmatpush.msra.mxu0 0.0
      %962 = vmatpush.msra.mxu0 0.0
      %963 = vmatpush.msra.mxu0 0.0
      %964 = vmatpush.msra.mxu0 0.0
      %965 = vmatpush.msra.mxu0 0.0
      %966 = vmatpush.msra.mxu0 0.0
      %967 = vmatpush.msra.mxu0 0.0
      %968 = vmatpush.msra.mxu0 %v943
      %969 = vmatmul.f32.gmra.mxu0 %v945
      %v970 = vpop.f32.mrf.mxu0
      %v971 = vadd.f32 0.0, %v970
      %972 = vmatmul.f32.gmra.mxu0 %v948
      %v973 = vpop.f32.mrf.mxu0
      %v974 = vadd.f32 0.0, %v973
      %975 = vmatmul.f32.gmra.mxu0 %v951
      %v976 = vpop.f32.mrf.mxu0
      %v977 = vadd.f32 0.0, %v976
      %978 = vdwg.mxu0
      %v979 = vadd.f32 %v929, %v971
      %v980 = vadd.f32 %v930, %v974
      %v981 = vadd.f32 %v931, %v977
      %v982 = vld [vmem:[%s9] sm:$0xff]
      %v983 = vld [vmem:[%s9 + $0x8] sm:$0xff]
      %v984 = vld [vmem:[%s9 + $0x10] sm:$0xff]
      %v985 = vld [vmem:[%s8] sm:$0xff]
      %v986 = vld [vmem:[%s8 + $0x8] sm:$0xff]
      %v987 = vld [vmem:[%s8 + $0x10] sm:$0xf]
      %989 = vset.pattern.permute.xlu0 0
      %990 = vperm.xlu0 %989, %v985
      %v991 = vpop.permute.xlu0 %990
      %994 = vset.pattern.permute.xlu0 0
      %995 = vperm.xlu0 %994, %v986
      %v996 = vpop.permute.xlu0 %995
      %999 = vset.pattern.permute.xlu0 0
      %1000 = vperm.xlu0 %999, %v987
      %v1001 = vpop.permute.xlu0 %1000
      %vm1003 = vcmask 195584
      %v1005 = vsel %vm1003, %v979, 0
      %v1008 = vsel %vm1003, %v980, 0
      %v1011 = vsel %vm1003, %v981, 0
      %1013 = vmatpush.msra.mxu0 0.0
      %1014 = vmatpush.msra.mxu0 0.0
      %1015 = vmatpush.msra.mxu0 0.0
      %1016 = vmatpush.msra.mxu0 0.0
      %1017 = vmatpush.msra.mxu0 0.0
      %1018 = vmatpush.msra.mxu0 0.0
      %1019 = vmatpush.msra.mxu0 0.0
      %1020 = vmatpush.msra.mxu0 0.0
      %1021 = vmatpush.msra.mxu0 0.0
      %1022 = vmatpush.msra.mxu0 0.0
      %1023 = vmatpush.msra.mxu0 0.0
      %1024 = vmatpush.msra.mxu0 0.0
      %1025 = vmatpush.msra.mxu0 0.0
      %1026 = vmatpush.msra.mxu0 %v984
      %1027 = vmatpush.msra.mxu0 %v983
      %1028 = vmatpush.msra.mxu0 %v982
      %1029 = vmatmul.f32.gmra.mxu0 %v1005
      %v1030 = vpop.f32.mrf.mxu0
      %v1031 = vadd.f32 %v991, %v1030
      %1032 = vmatmul.f32.gmra.mxu0 %v1008
      %v1033 = vpop.f32.mrf.mxu0
      %v1034 = vadd.f32 %v996, %v1033
      %1035 = vmatmul.f32.gmra.mxu0 %v1011
      %v1036 = vpop.f32.mrf.mxu0
      %v1037 = vadd.f32 %v1001, %v1036
      %1038 = vdwg.mxu0
      %v1039 = vmax.f32 %v1031, 0.0
      %v1040 = vmax.f32 %v1034, 0.0
      %v1041 = vmax.f32 %v1037, 0.0
      %v1042 = vld [vmem:[%s10] sm:$0x7]
      %v1043 = vld [vmem:[%s11] sm:$0x7]
      %1045 = vset.pattern.permute.xlu0 0
      %1046 = vperm.xlu0 %1045, %v1043
      %v1047 = vpop.permute.xlu0 %1046
      %v1050 = vsel %vm892, %v1042, 0
      %v1053 = vsel %vm421, %v1041, 0
      %1055 = vmatpush.msra.mxu0 0.0
      %1056 = vmatpush.msra.mxu0 0.0
      %1057 = vmatpush.msra.mxu0 0.0
      %1058 = vmatpush.msra.mxu0 0.0
      %1059 = vmatpush.msra.mxu0 0.0
      %1060 = vmatpush.msra.mxu0 0.0
      %1061 = vmatpush.msra.mxu0 0.0
      %1062 = vmatpush.msra.mxu0 0.0
      %1063 = vmatpush.msra.mxu0 0.0
      %1064 = vmatpush.msra.mxu0 0.0
      %1065 = vmatpush.msra.mxu0 0.0
      %1066 = vmatpush.msra.mxu0 0.0
      %1067 = vmatpush.msra.mxu0 0.0
      %1068 = vmatpush.msra.mxu0 %v1053
      %1069 = vmatpush.msra.mxu0 %v1040
      %1070 = vmatpush.msra.mxu0 %v1039
      %1071 = vmatmul.f32.gmra.mxu0 %v1050
      %v1072 = vpop.f32.mrf.mxu0
      %v1073 = vadd.f32 %v1047, %v1072
      %1074 = vdwg.mxu0
      %vm1075 = vcmask 26624
      %1076 = vst.msk [vmem:[%s408] sm:$0x7] %vm1075, %v1073
      %p1077 = scmp.lt.s32.totalorder %s23, 1
      %s1078 = scalar_select %p1077, %s23, 1
      %s1079 = smul.addr %s1078, 4
      %s1080 = scalar_lea.vmem %s12, %s1079
      // Predicated region
      $region69: #{cnn_forward.1} parent=67 // pred_check
        %p1081 = pneg %p298
      $region70: #{cnn_forward.1} parent=67 // pred_check_branch
        %1083 = sbr.rel (%p1081) target = $region72
      $region71: #{cnn_forward.1} parent=67 // pred_region
        _
      $region72: #{cnn_forward.1} parent=67 // pred_fallthru
        _
    $region68: #{cnn_forward.1} parent=5 // pred_fallthru
      _
    %p1084 = scmp.le.s32.totalorder 2, %s18
    // Predicated region
    $region73: #{cnn_forward.1} parent=5 // pred_check
      %p1085 = pneg %p1084
    $region74: #{cnn_forward.1} parent=5 // pred_check_branch
      %1087 = sbr.rel (%p1085) target = $region76
    $region75: #{cnn_forward.1} parent=5 // pred_region
      %s1088 = ssub.s32 %s18, 2
      // Predicated region
      $region77: #{cnn_forward.1} parent=75 // pred_check
        %p1089 = pneg %p304
      $region78: #{cnn_forward.1} parent=75 // pred_check_branch
        %1091 = sbr.rel (%p1089) target = $region80
      $region79: #{cnn_forward.1} parent=75 // pred_region
        %p1092 = scmp.lt.s32.totalorder %s24, 1
        %s1093 = scalar_select %p1092, %s24, 1
        %s1094 = smul.addr %s1093, 4
        %s1095 = scalar_lea.vmem %s12, %s1094
      $region80: #{cnn_forward.1} parent=75 // pred_fallthru
        _
    $region76: #{cnn_forward.1} parent=5 // pred_fallthru
      _
  $region6: #{cnn_forward.1} parent=0 // loop_footer
    %s22 = sadd.s32 1, %s18
  $region7: #{cnn_forward.1} parent=0 // loop_footer_branch
    %17 = sbr.rel target = $region3
  $region8: #{cnn_forward.1} parent=0 // loop_exit
    _

</llo_original>
